<compile_context>
chip_gen: v7x
topology: tpu7x:2x2x1
jax: 0.10.0
libtpu: 0.0.40
codegen_flags: <defaults>
</compile_context>

<pallas_src>
import jax
import jax.numpy as jnp
from jax.experimental import pallas as pl
from jax.experimental.pallas import tpu as pltpu

_LANE = 128


def _rot_opt_kernel(m_ref, t_ref, x_ref, out_ref):
    # m_ref  : SMEM (B, 9)          flattened M = K @ R per batch
    # t_ref  : SMEM (B, 3)          t' = K @ (T * clamp(scale, minT, maxT))
    # x_ref  : VMEM (1, 3, TS, 128) lane/sublane-dense point tile (channel-major)
    # out_ref: VMEM (1, 2, TS, 128) projected (u, v) tile
    b = pl.program_id(0)

    x0 = x_ref[0, 0, :, :]
    x1 = x_ref[0, 1, :, :]
    x2 = x_ref[0, 2, :, :]

    # SMEM scalar reads -> sreg splats into dense (TS, 128) VPU FMAs.
    z0 = m_ref[b, 0] * x0 + m_ref[b, 1] * x1 + m_ref[b, 2] * x2 + t_ref[b, 0]
    z1 = m_ref[b, 3] * x0 + m_ref[b, 4] * x1 + m_ref[b, 5] * x2 + t_ref[b, 1]
    z2 = m_ref[b, 6] * x0 + m_ref[b, 7] * x1 + m_ref[b, 8] * x2 + t_ref[b, 2]

    # One reciprocal for the perspective divide (exact; approx=True would need
    # a Newton refinement to hold the 1e-5 tolerance).
    inv = pl.reciprocal(z2)
    out_ref[0, 0, :, :] = (z0 * inv).astype(out_ref.dtype)
    out_ref[0, 1, :, :] = (z1 * inv).astype(out_ref.dtype)


def _quaternion_to_matrix(quat):
    """pytorch3d quaternion_to_matrix for (B, 4) quaternions (w, x, y, z)."""
    B = quat.shape[0]
    r, i, j, k = quat[:, 0], quat[:, 1], quat[:, 2], quat[:, 3]
    two_s = 2.0 / jnp.sum(quat * quat, axis=-1)
    return jnp.stack([
        1 - two_s * (j * j + k * k), two_s * (i * j - k * r), two_s * (i * k + j * r),
        two_s * (i * j + k * r), 1 - two_s * (i * i + k * k), two_s * (j * k - i * r),
        two_s * (i * k - j * r), two_s * (j * k + i * r), 1 - two_s * (i * i + j * j),
    ], axis=-1).reshape(B, 3, 3)


def rot_opt_forward(x, T, K, rot_vect, rot_vect_y, scale,
                    *, min_t=0.5, max_t=2.0, row_tile=512):
    """RotOpt.forward.  x: (B, N, 3), T: (B, 1, 3), K: (B, 3, 3) -> (B, N, 2)."""
    B, N, _ = x.shape
    assert row_tile % 8 == 0

    # ---- tiny per-batch preprocessing in XLA (12 + 3 floats per batch) ----
    zeros = jnp.zeros_like(rot_vect)
    # axis='y': only the w and y quaternion components are parameters.
    quat = jnp.concatenate([rot_vect, zeros, rot_vect_y, zeros], axis=-1)  # (B, 4)
    R = _quaternion_to_matrix(quat)                                        # (B, 3, 3)
    M = jnp.einsum('bij,bjk->bik', K, R)                                   # K @ R
    t_scaled = (T * jnp.clip(scale, min_t, max_t))[:, 0, :]                # (B, 3)
    tp = jnp.einsum('bij,bj->bi', K, t_scaled)                             # K @ t
    m_flat = M.reshape(B, 9).astype(jnp.float32)
    tp = tp.astype(jnp.float32)

    # ---- lane/sublane-dense point layout: (B, 3, rows, 128) ----
    rows = -(-N // _LANE)                       # ceil(N / 128)
    if rows <= row_tile:
        ts = rows                               # one row-tile per batch
        rows_p = rows
    else:
        ts = row_tile
        rows_p = -(-rows // ts) * ts            # pad rows to a tile multiple
    n_pad = rows_p * _LANE

    x_cm = jnp.transpose(x, (0, 2, 1))          # (B, 3, N) channel-major
    if n_pad != N:
        x_cm = jnp.pad(x_cm, ((0, 0), (0, 0), (0, n_pad - N)))
    x_blk = x_cm.reshape(B, 3, rows_p, _LANE)

    out_blk = pl.pallas_call(
        _rot_opt_kernel,
        out_shape=jax.ShapeDtypeStruct((B, 2, rows_p, _LANE), x.dtype),
        grid=(B, rows_p // ts),
        in_specs=[
            pl.BlockSpec(memory_space=pltpu.MemorySpace.SMEM),   # M   (B, 9)
            pl.BlockSpec(memory_space=pltpu.MemorySpace.SMEM),   # t'  (B, 3)
            pl.BlockSpec((1, 3, ts, _LANE), lambda b, n: (b, 0, n, 0)),
        ],
        out_specs=pl.BlockSpec((1, 2, ts, _LANE), lambda b, n: (b, 0, n, 0)),
        compiler_params=pltpu.CompilerParams(
            dimension_semantics=("parallel", "parallel")),
    )(m_flat, tp, x_blk)

    # Crop padding; return (B, N, 2) to match the PyTorch module.  Callers that
    # can consume channel-major output should take out_blk directly and skip
    # this lane-sparse transpose.
    out_cm = out_blk.reshape(B, 2, n_pad)[:, :, :N]
    return jnp.transpose(out_cm, (0, 2, 1))


def rot_opt_reference(x, T, K, rot_vect, rot_vect_y, scale,
                      min_t=0.5, max_t=2.0):
    """Pure-JAX reference mirroring the PyTorch forward (un-folded)."""
    zeros = jnp.zeros_like(rot_vect)
    quat = jnp.concatenate([rot_vect, zeros, rot_vect_y, zeros], axis=-1)
    R = _quaternion_to_matrix(quat)
    xc = jnp.einsum('bij,bnj->bin', R, x) \
        + jnp.transpose(T * jnp.clip(scale, min_t, max_t), (0, 2, 1))
    xc = jnp.einsum('bij,bjn->bin', K, xc)
    xc = jnp.transpose(xc, (0, 2, 1))
    return xc[:, :, :2] / xc[:, :, 2:]


if __name__ == "__main__":
    key = jax.random.PRNGKey(0)
    B, N = 2, 200                       # N not a multiple of 128: exercises padding/crop
    k1, k2, k3 = jax.random.split(key, 3)

    # Points with positive depth so the perspective divide is well-defined.
    xy = jax.random.uniform(k1, (B, N, 2), minval=-1.0, maxval=1.0)
    z = jax.random.uniform(k2, (B, N, 1), minval=1.0, maxval=3.0)
    x = jnp.concatenate([xy, z], axis=-1).astype(jnp.float32)

    T = jnp.concatenate([
        jax.random.uniform(k3, (B, 1, 2), minval=-0.5, maxval=0.5),
        jnp.full((B, 1, 1), 1.5),
    ], axis=-1).astype(jnp.float32)

    K = jnp.tile(jnp.array([[2.0, 0.0, 0.5],
                            [0.0, 2.0, 0.5],
                            [0.0, 0.0, 1.0]], dtype=jnp.float32)[None],
                 (B, 1, 1))

    # Deterministic parameters consistent with RotOpt(batch_size=B, axis='y');
    # rot_vect_y is given a non-zero value so the rotation path is non-trivial.
    rot_vect = jnp.ones((B, 1), jnp.float32)       # quaternion w component
    rot_vect_y = jnp.full((B, 1), 0.3, jnp.float32)  # quaternion y component
    scale = jnp.full((B, 1, 1), 1.2, jnp.float32)

    out = rot_opt_forward(x, T, K, rot_vect, rot_vect_y, scale,
                          min_t=0.5, max_t=2.0)
    out = jax.block_until_ready(out)

    ref = rot_opt_reference(x, T, K, rot_vect, rot_vect_y, scale,
                            min_t=0.5, max_t=2.0)
    assert out.shape == (B, N, 2)
    assert jnp.allclose(out, ref, atol=1e-5, rtol=1e-5)
    print("KERNEL_OK")
</pallas_src>

<mosaic_0001>
module attributes {stable_mosaic.version = 11 : i64} {
  func.func @_rot_opt_kernel(%arg0: i32, %arg1: i32, %arg2: memref<2x9xf32, #tpu.memory_space<smem>>, %arg3: memref<2x3xf32, #tpu.memory_space<smem>>, %arg4: memref<1x3x2x128xf32, #tpu.memory_space<vmem>>, %arg5: memref<1x2x2x128xf32, #tpu.memory_space<vmem>>) attributes {dimension_semantics = [#tpu.dimension_semantics<parallel>, #tpu.dimension_semantics<parallel>], iteration_bounds = array<i64: 2, 1>, scalar_prefetch = 0 : i64, scratch_operands = 0 : i64, tpu.core_type = #tpu.core_type<tc>, window_params = [{transform_indices = @transform_0, window_bounds = array<i64: 2, 9>}, {transform_indices = @transform_1, window_bounds = array<i64: 2, 3>}, {transform_indices = @transform_2, window_bounds = array<i64: 1, 3, 2, 128>}, {transform_indices = @transform_3, window_bounds = array<i64: 1, 2, 2, 128>}]} {
    %c0 = arith.constant 0 : index
    %c0_0 = arith.constant 0 : index
    %c0_1 = arith.constant 0 : index
    %c0_2 = arith.constant 0 : index
    %0 = vector.load %arg4[%c0, %c0_0, %c0_1, %c0_2] : memref<1x3x2x128xf32, #tpu.memory_space<vmem>>, vector<1x1x2x128xf32>
    %1 = vector.shape_cast %0 : vector<1x1x2x128xf32> to vector<2x128xf32>
    %c0_3 = arith.constant 0 : index
    %c1 = arith.constant 1 : index
    %c0_4 = arith.constant 0 : index
    %c0_5 = arith.constant 0 : index
    %2 = vector.load %arg4[%c0_3, %c1, %c0_4, %c0_5] : memref<1x3x2x128xf32, #tpu.memory_space<vmem>>, vector<1x1x2x128xf32>
    %3 = vector.shape_cast %2 : vector<1x1x2x128xf32> to vector<2x128xf32>
    %c0_6 = arith.constant 0 : index
    %c2 = arith.constant 2 : index
    %c0_7 = arith.constant 0 : index
    %c0_8 = arith.constant 0 : index
    %4 = vector.load %arg4[%c0_6, %c2, %c0_7, %c0_8] : memref<1x3x2x128xf32, #tpu.memory_space<vmem>>, vector<1x1x2x128xf32>
    %5 = vector.shape_cast %4 : vector<1x1x2x128xf32> to vector<2x128xf32>
    %6 = arith.index_cast %arg0 : i32 to index
    %c0_9 = arith.constant 0 : index
    %7 = memref.load %arg2[%6, %c0_9] : memref<2x9xf32, #tpu.memory_space<smem>>
    %8 = vector.broadcast %7 : f32 to vector<2x128xf32>
    %9 = arith.mulf %8, %1 : vector<2x128xf32>
    %10 = arith.index_cast %arg0 : i32 to index
    %c1_10 = arith.constant 1 : index
    %11 = memref.load %arg2[%10, %c1_10] : memref<2x9xf32, #tpu.memory_space<smem>>
    %12 = vector.broadcast %11 : f32 to vector<2x128xf32>
    %13 = arith.mulf %12, %3 : vector<2x128xf32>
    %14 = arith.addf %9, %13 : vector<2x128xf32>
    %15 = arith.index_cast %arg0 : i32 to index
    %c2_11 = arith.constant 2 : index
    %16 = memref.load %arg2[%15, %c2_11] : memref<2x9xf32, #tpu.memory_space<smem>>
    %17 = vector.broadcast %16 : f32 to vector<2x128xf32>
    %18 = arith.mulf %17, %5 : vector<2x128xf32>
    %19 = arith.addf %14, %18 : vector<2x128xf32>
    %20 = arith.index_cast %arg0 : i32 to index
    %c0_12 = arith.constant 0 : index
    %21 = memref.load %arg3[%20, %c0_12] : memref<2x3xf32, #tpu.memory_space<smem>>
    %22 = vector.broadcast %21 : f32 to vector<2x128xf32>
    %23 = arith.addf %19, %22 : vector<2x128xf32>
    %24 = arith.index_cast %arg0 : i32 to index
    %c3 = arith.constant 3 : index
    %25 = memref.load %arg2[%24, %c3] : memref<2x9xf32, #tpu.memory_space<smem>>
    %26 = vector.broadcast %25 : f32 to vector<2x128xf32>
    %27 = arith.mulf %26, %1 : vector<2x128xf32>
    %28 = arith.index_cast %arg0 : i32 to index
    %c4 = arith.constant 4 : index
    %29 = memref.load %arg2[%28, %c4] : memref<2x9xf32, #tpu.memory_space<smem>>
    %30 = vector.broadcast %29 : f32 to vector<2x128xf32>
    %31 = arith.mulf %30, %3 : vector<2x128xf32>
    %32 = arith.addf %27, %31 : vector<2x128xf32>
    %33 = arith.index_cast %arg0 : i32 to index
    %c5 = arith.constant 5 : index
    %34 = memref.load %arg2[%33, %c5] : memref<2x9xf32, #tpu.memory_space<smem>>
    %35 = vector.broadcast %34 : f32 to vector<2x128xf32>
    %36 = arith.mulf %35, %5 : vector<2x128xf32>
    %37 = arith.addf %32, %36 : vector<2x128xf32>
    %38 = arith.index_cast %arg0 : i32 to index
    %c1_13 = arith.constant 1 : index
    %39 = memref.load %arg3[%38, %c1_13] : memref<2x3xf32, #tpu.memory_space<smem>>
    %40 = vector.broadcast %39 : f32 to vector<2x128xf32>
    %41 = arith.addf %37, %40 : vector<2x128xf32>
    %42 = arith.index_cast %arg0 : i32 to index
    %c6 = arith.constant 6 : index
    %43 = memref.load %arg2[%42, %c6] : memref<2x9xf32, #tpu.memory_space<smem>>
    %44 = vector.broadcast %43 : f32 to vector<2x128xf32>
    %45 = arith.mulf %44, %1 : vector<2x128xf32>
    %46 = arith.index_cast %arg0 : i32 to index
    %c7 = arith.constant 7 : index
    %47 = memref.load %arg2[%46, %c7] : memref<2x9xf32, #tpu.memory_space<smem>>
    %48 = vector.broadcast %47 : f32 to vector<2x128xf32>
    %49 = arith.mulf %48, %3 : vector<2x128xf32>
    %50 = arith.addf %45, %49 : vector<2x128xf32>
    %51 = arith.index_cast %arg0 : i32 to index
    %c8 = arith.constant 8 : index
    %52 = memref.load %arg2[%51, %c8] : memref<2x9xf32, #tpu.memory_space<smem>>
    %53 = vector.broadcast %52 : f32 to vector<2x128xf32>
    %54 = arith.mulf %53, %5 : vector<2x128xf32>
    %55 = arith.addf %50, %54 : vector<2x128xf32>
    %56 = arith.index_cast %arg0 : i32 to index
    %c2_14 = arith.constant 2 : index
    %57 = memref.load %arg3[%56, %c2_14] : memref<2x3xf32, #tpu.memory_space<smem>>
    %58 = vector.broadcast %57 : f32 to vector<2x128xf32>
    %59 = arith.addf %55, %58 : vector<2x128xf32>
    %60 = tpu.reciprocal %59 : vector<2x128xf32> -> vector<2x128xf32>
    %61 = arith.mulf %23, %60 : vector<2x128xf32>
    %c0_15 = arith.constant 0 : index
    %c0_16 = arith.constant 0 : index
    %c0_17 = arith.constant 0 : index
    %c0_18 = arith.constant 0 : index
    %62 = vector.load %arg5[%c0_15, %c0_16, %c0_17, %c0_18] : memref<1x2x2x128xf32, #tpu.memory_space<vmem>>, vector<1x1x2x128xf32>
    %63 = vector.shape_cast %62 : vector<1x1x2x128xf32> to vector<2x128xf32>
    %64 = vector.shape_cast %61 : vector<2x128xf32> to vector<1x1x2x128xf32>
    tpu.vector_store %arg5[%c0_15, %c0_16, %c0_17, %c0_18], %64 {strides = array<i32>} : memref<1x2x2x128xf32, #tpu.memory_space<vmem>>, vector<1x1x2x128xf32>,
    %65 = arith.mulf %41, %60 : vector<2x128xf32>
    %c0_19 = arith.constant 0 : index
    %c1_20 = arith.constant 1 : index
    %c0_21 = arith.constant 0 : index
    %c0_22 = arith.constant 0 : index
    %66 = vector.load %arg5[%c0_19, %c1_20, %c0_21, %c0_22] : memref<1x2x2x128xf32, #tpu.memory_space<vmem>>, vector<1x1x2x128xf32>
    %67 = vector.shape_cast %66 : vector<1x1x2x128xf32> to vector<2x128xf32>
    %68 = vector.shape_cast %65 : vector<2x128xf32> to vector<1x1x2x128xf32>
    tpu.vector_store %arg5[%c0_19, %c1_20, %c0_21, %c0_22], %68 {strides = array<i32>} : memref<1x2x2x128xf32, #tpu.memory_space<vmem>>, vector<1x1x2x128xf32>,
    return
  }
  func.func @transform_0(%arg0: i32, %arg1: i32) -> (i32, i32) {
    %c0_i32 = arith.constant 0 : i32
    %c0_i32_0 = arith.constant 0 : i32
    %c0_i32_1 = arith.constant 0 : i32
    return %c0_i32, %c0_i32_0 : i32, i32
  }
  func.func @transform_1(%arg0: i32, %arg1: i32) -> (i32, i32) {
    %c0_i32 = arith.constant 0 : i32
    %c0_i32_0 = arith.constant 0 : i32
    %c0_i32_1 = arith.constant 0 : i32
    return %c0_i32, %c0_i32_0 : i32, i32
  }
  func.func @transform_2(%arg0: i32, %arg1: i32) -> (i32, i32, i32, i32) {
    %c0_i32 = arith.constant 0 : i32
    %c0_i32_0 = arith.constant 0 : i32
    %c0_i32_1 = arith.constant 0 : i32
    return %arg0, %c0_i32, %arg1, %c0_i32_0 : i32, i32, i32, i32
  }
  func.func @transform_3(%arg0: i32, %arg1: i32) -> (i32, i32, i32, i32) {
    %c0_i32 = arith.constant 0 : i32
    %c0_i32_0 = arith.constant 0 : i32
    %c0_i32_1 = arith.constant 0 : i32
    return %arg0, %c0_i32, %arg1, %c0_i32_0 : i32, i32, i32, i32
  }
}

</mosaic_0001>

<llo_original>
// kernel: tpu_custom_call.1
$region0: #{tpu_custom_call.1}
  #allocation0 [shape = 'u32[]', space=smem, size = 0x4, offset = 0x4, fixed_abs, tag = 'smem constant byte address 0x4 - core index']
  #allocation1 [shape = 'u32[144,128]{1,0:T(1,128)}', space=vmem, size = 0x12000, scoped, tag = 'internal scratch']
  %s0 = inlined_call_operand.hbm [shape: f32[2,9], index: 0, kind: input, shape index: {}]
  %s1 = inlined_call_operand.vmem [shape: f32[2,3], index: 1, kind: input, shape index: {}]
  %s2 = inlined_call_operand.hbm [shape: f32[2,3,2,128], index: 2, kind: input, shape index: {}]
  %s3 = inlined_call_operand.hbm [shape: f32[2,2,2,128], index: 3, kind: output, shape index: {}]
  %s4 = sld [smem:[#allocation0]]
  $region57: #{tpu_custom_call.1} parent=0
    _
  %s6 = ssub.s32 1, %s4
  %s7 = scalar_select 0, %s6, %s4
  $region1: #{tpu_custom_call.1} parent=0
    #allocation2 [shape = 'u8[1024]{0}', space=smem, size = 0x400, scoped, tag = 'input window, operand 0, single buffered']
    #allocation3 [shape = 's32[2]{0}', space=sflag, size = 0x8, scoped, tag = 'scoped memory for tpu_custom_call.1']
    #allocation4 [shape = 's32[2]{0}', space=sflag, size = 0x8, scoped, tag = 'scoped memory for tpu_custom_call.1']
    #allocation5 [shape = 's32[2]{0}', space=sflag, size = 0x8, scoped, tag = 'scoped memory for tpu_custom_call.1']
    #allocation6 [shape = 's32[2]{0}', space=sflag, size = 0x8, scoped, tag = 'scoped memory for tpu_custom_call.1']
    #allocation7 [shape = 'u8[1024]{0}', space=smem, size = 0x400, scoped, tag = 'input window, operand 1, single buffered']
    #allocation8 [shape = 'u8[6144]{0}', space=vmem, size = 0x1800, scoped, tag = 'input window, operand 2']
    #allocation9 [shape = 'u8[4096]{0}', space=vmem, size = 0x1000, scoped, tag = 'output window, operand 0']
    %8 = vsyncpa [#allocation5], 0
    %9 = vsyncpa [#allocation6], 0
    %10 = vsyncpa [#allocation3], 0
    %s11 = scalar_lea.sflag [#allocation3], 1
    %12 = vsyncpa %s11, 0
    %13 = vsyncpa [#allocation4], 0
    %s14 = scalar_lea.sflag [#allocation4], 1
    %15 = vsyncpa %s14, 0
    loop: start=0, step=1, limit=4
    $region2: #{tpu_custom_call.1} parent=1 // loop_pre_header
      _
    $region3: #{tpu_custom_call.1} parent=1 // loop_header
      %s17 = sphi 0, %s21
      %p18 = scmp.ge.s32.totalorder %s17, 4
      %s24 = sphi 0, %s36
      %s25 = sphi 0, %s32
      %s26 = sphi 0, %s24
      %s27 = sphi 0, %s25
      %s28 = sphi 0, %s26
      %s29 = sphi 0, %s27
      %s37 = sphi 0, %s37
      %s39 = sphi 0, %s37
      %s40 = sphi 0, %s39
      %s54 = sphi 0, %s40
      %s58 = sphi 0, %s58
      %s60 = sphi 0, %s58
      %s61 = sphi 0, %s60
      %s75 = sphi 0, %s61
      %s83 = sphi 0, %s85
      %s86 = sphi 0, %s83
      %s87 = sphi 0, %s86
      %s103 = sphi 0, %s87
      %s111 = sphi 0, %s113
      %s114 = sphi 0, %s111
      %s115 = sphi 0, %s114
      %s131 = sphi 0, %s115
    $region4: #{tpu_custom_call.1} parent=1 // loop_header_branch
      %20 = sbr.rel (%p18) target = $region8
    $region5: #{tpu_custom_call.1} parent=1 // loop_body
      %s22 = ssub.s32 %s17, 1
      %s23 = ssub.s32 %s17, 2
      %s30 = sadd.s32 1, %s25
      %p31 = scmp.ge.s32.totalorder %s30, 1
      %s32 = scalar_select %p31, 0, %s30
      %s33 = sadd.s32 1, %s24
      %s34 = scalar_select %p31, %s33, %s24
      %p35 = scmp.ge.s32.totalorder %s34, 2
      %s36 = scalar_select %p35, 0, %s34
      %s38 = sadd.s32 %s37, 1
      %p41 = scmp.eq.s32.totalorder %s17, 1
      %p42 = scmp.ne.s32.totalorder %s37, %s39
      %p43 = scmp.eq.s32.totalorder %s17, 0
      %p44 = por %p42, %p43
      %p45 = scmp.ne.s32.totalorder %s37, %s39
      %p46 = scmp.eq.s32.totalorder %s22, 1
      %p47 = por %p45, %p46
      %p48 = scmp.ne.s32.totalorder %s39, %s40
      %p49 = scmp.eq.s32.totalorder %s22, 0
      %p50 = por %p48, %p49
      %p51 = scmp.ne.s32.totalorder %s39, %s40
      %p52 = scmp.eq.s32.totalorder %s23, 1
      %p53 = por %p51, %p52
      %p55 = scmp.ne.s32.totalorder %s40, %s54
      %p56 = scmp.eq.s32.totalorder %s23, 0
      %p57 = por %p55, %p56
      %s59 = sadd.s32 %s58, 1
      %p62 = scmp.eq.s32.totalorder %s17, 1
      %p63 = scmp.ne.s32.totalorder %s58, %s60
      %p64 = scmp.eq.s32.totalorder %s17, 0
      %p65 = por %p63, %p64
      %p66 = scmp.ne.s32.totalorder %s58, %s60
      %p67 = scmp.eq.s32.totalorder %s22, 1
      %p68 = por %p66, %p67
      %p69 = scmp.ne.s32.totalorder %s60, %s61
      %p70 = scmp.eq.s32.totalorder %s22, 0
      %p71 = por %p69, %p70
      %p72 = scmp.ne.s32.totalorder %s60, %s61
      %p73 = scmp.eq.s32.totalorder %s23, 1
      %p74 = por %p72, %p73
      %p76 = scmp.ne.s32.totalorder %s61, %s75
      %p77 = scmp.eq.s32.totalorder %s23, 0
      %p78 = por %p76, %p77
      %s79 = ssub.s32 %s24, %s36
      %s80 = ssub.s32 %s25, %s32
      %s81 = sor.u32 %s79, %s80
      %p82 = scmp.eq.s32.totalorder %s81, 0
      %s84 = sadd.s32 %s83, 1
      %s85 = scalar_select %p82, %s83, %s84
      %p88 = pneg %p82
      %p89 = scmp.eq.s32.totalorder %s17, 1
      %p90 = por %p88, %p89
      %p91 = scmp.ne.s32.totalorder %s83, %s86
      %p92 = scmp.eq.s32.totalorder %s17, 0
      %p93 = por %p91, %p92
      %p94 = scmp.ne.s32.totalorder %s83, %s86
      %p95 = scmp.eq.s32.totalorder %s22, 1
      %p96 = por %p94, %p95
      %p97 = scmp.ne.s32.totalorder %s86, %s87
      %p98 = scmp.eq.s32.totalorder %s22, 0
      %p99 = por %p97, %p98
      %p100 = scmp.ne.s32.totalorder %s86, %s87
      %p101 = scmp.eq.s32.totalorder %s23, 1
      %p102 = por %p100, %p101
      %p104 = scmp.ne.s32.totalorder %s87, %s103
      %p105 = scmp.eq.s32.totalorder %s23, 0
      %p106 = por %p104, %p105
      %s107 = ssub.s32 %s24, %s36
      %s108 = ssub.s32 %s25, %s32
      %s109 = sor.u32 %s107, %s108
      %p110 = scmp.eq.s32.totalorder %s109, 0
      %s112 = sadd.s32 %s111, 1
      %s113 = scalar_select %p110, %s111, %s112
      %p116 = pneg %p110
      %p117 = scmp.eq.s32.totalorder %s17, 1
      %p118 = por %p116, %p117
      %p119 = scmp.ne.s32.totalorder %s111, %s114
      %p120 = scmp.eq.s32.totalorder %s17, 0
      %p121 = por %p119, %p120
      %p122 = scmp.ne.s32.totalorder %s111, %s114
      %p123 = scmp.eq.s32.totalorder %s22, 1
      %p124 = por %p122, %p123
      %p125 = scmp.ne.s32.totalorder %s114, %s115
      %p126 = scmp.eq.s32.totalorder %s22, 0
      %p127 = por %p125, %p126
      %p128 = scmp.ne.s32.totalorder %s114, %s115
      %p129 = scmp.eq.s32.totalorder %s23, 1
      %p130 = por %p128, %p129
      %p132 = scmp.ne.s32.totalorder %s115, %s131
      %p133 = scmp.eq.s32.totalorder %s23, 0
      %p134 = por %p132, %p133
      %p135 = scmp.le.s32.totalorder 1, %s17
      %p136 = scmp.lt.s32.totalorder %s17, 3
      %p137 = pnand %p135, %p136
      %p138 = pneg %p137
      // Predicated region
      $region9: #{tpu_custom_call.1} parent=5 // pred_check
        _
      $region10: #{tpu_custom_call.1} parent=5 // pred_check_branch
        %140 = sbr.rel (%p137) target = $region12
      $region11: #{tpu_custom_call.1} parent=5 // pred_region
        %s141 = ssub.s32 %s17, 1
        // Predicated region
        $region13: #{tpu_custom_call.1} parent=11 // pred_check
          %p142 = pneg %p50
        $region14: #{tpu_custom_call.1} parent=11 // pred_check_branch
          %144 = sbr.rel (%p142) target = $region16
        $region15: #{tpu_custom_call.1} parent=11 // pred_region
          %s146 = ssub.s32 32, 32
          %147 = vsyncadd [#allocation5], %s146
          %150 = dma.hbm_to_smem %s0, 32, [#allocation2], [#allocation5]
        $region16: #{tpu_custom_call.1} parent=11 // pred_fallthru
          _
        // Predicated region
        $region17: #{tpu_custom_call.1} parent=11 // pred_check
          %p151 = pneg %p71
        $region18: #{tpu_custom_call.1} parent=11 // pred_check_branch
          %153 = sbr.rel (%p151) target = $region20
        $region19: #{tpu_custom_call.1} parent=11 // pred_region
          %s155 = ssub.s32 32, 32
          %156 = vsyncadd [#allocation6], %s155
          %s158 = sshll.u32 %s1, 4
          %s159 = int_to_ptr.vmem [resolvable:$true] %s158
          %161 = dma.vmem_to_smem %s159, 32, [#allocation7], [#allocation6]
        $region20: #{tpu_custom_call.1} parent=11 // pred_fallthru
          _
      $region12: #{tpu_custom_call.1} parent=5 // pred_fallthru
        _
      %p162 = scmp.lt.s32.totalorder %s17, 2
      // Predicated region
      $region21: #{tpu_custom_call.1} parent=5 // pred_check
        %p163 = pneg %p162
      $region22: #{tpu_custom_call.1} parent=5 // pred_check_branch
        %165 = sbr.rel (%p163) target = $region24
      $region23: #{tpu_custom_call.1} parent=5 // pred_region
        // Predicated region
        $region25: #{tpu_custom_call.1} parent=23 // pred_check
          %p166 = pneg %p93
        $region26: #{tpu_custom_call.1} parent=23 // pred_check_branch
          %168 = sbr.rel (%p166) target = $region28
        $region27: #{tpu_custom_call.1} parent=23 // pred_region
          %s169 = sand.u32 %s83, 1
          %s170 = scalar_lea.sflag [#allocation3], %s169
          %s171 = sand.u32 %s83, 1
          %s172 = smul.addr %s171, 6
          %s173 = scalar_lea.vmem [#allocation8], %s172
          %s175 = ssub.s32 96, 96
          %176 = vsyncadd %s170, %s175
          %s177 = smul.addr %s24, 3
          %s178 = sadd.s32 %s25, %s177
          %s179 = smul.addr %s178, 32
          %s180 = scalar_lea.hbm %s2, %s179
          %s181 = sshll.u32 %s173, 4
          %s182 = int_to_ptr.vmem [resolvable:$true] %s181
          %187 = dma.hbm_to_vmem [thread:$0]  %s180, 96, %s182, %s170, 32, 32, 2
        $region28: #{tpu_custom_call.1} parent=23 // pred_fallthru
          _
      $region24: #{tpu_custom_call.1} parent=5 // pred_fallthru
        _
      %p188 = scmp.le.s32.totalorder 1, %s17
      %p189 = scmp.lt.s32.totalorder %s17, 3
      %p190 = pnand %p188, %p189
      %p191 = pneg %p190
      // Predicated region
      $region29: #{tpu_custom_call.1} parent=5 // pred_check
        _
      $region30: #{tpu_custom_call.1} parent=5 // pred_check_branch
        %193 = sbr.rel (%p190) target = $region32
      $region31: #{tpu_custom_call.1} parent=5 // pred_region
        %s194 = ssub.s32 %s17, 1
        // Predicated region
        $region33: #{tpu_custom_call.1} parent=31 // pred_check
          %p195 = pneg %p50
        $region34: #{tpu_custom_call.1} parent=31 // pred_check_branch
          %197 = sbr.rel (%p195) target = $region36
        $region35: #{tpu_custom_call.1} parent=31 // pred_region
          %198 = dma.done [#allocation5], 32
        $region36: #{tpu_custom_call.1} parent=31 // pred_fallthru
          _
        // Predicated region
        $region37: #{tpu_custom_call.1} parent=31 // pred_check
          %p199 = pneg %p71
        $region38: #{tpu_custom_call.1} parent=31 // pred_check_branch
          %201 = sbr.rel (%p199) target = $region40
        $region39: #{tpu_custom_call.1} parent=31 // pred_region
          %202 = dma.done [#allocation6], 32
        $region40: #{tpu_custom_call.1} parent=31 // pred_fallthru
          _
        %s203 = sand.u32 %s86, 1
        %s204 = scalar_lea.sflag [#allocation3], %s203
        %s205 = sand.u32 %s86, 1
        %s206 = smul.addr %s205, 6
        %s207 = scalar_lea.vmem [#allocation8], %s206
        // Predicated region
        $region41: #{tpu_custom_call.1} parent=31 // pred_check
          %p208 = pneg %p99
        $region42: #{tpu_custom_call.1} parent=31 // pred_check_branch
          %210 = sbr.rel (%p208) target = $region44
        $region43: #{tpu_custom_call.1} parent=31 // pred_region
          %211 = dma.done %s204, 96
        $region44: #{tpu_custom_call.1} parent=31 // pred_fallthru
          _
        %212 = sfence
        %p213 = pneg %p50
        %p214 = pneg %p47
        %p215 = pneg %p71
        %p216 = pneg %p68
        %s217 = sand.u32 %s86, 1
        %s218 = scalar_lea.sflag [#allocation3], %s217
        %s219 = sand.u32 %s86, 1
        %s220 = smul.addr %s219, 6
        %s221 = scalar_lea.vmem [#allocation8], %s220
        %p222 = pneg %p99
        %p223 = pneg %p96
        %p224 = pneg %p127
        %p225 = pneg %p124
        %s226 = sand.u32 %s114, 1
        %s227 = scalar_lea.sflag [#allocation4], %s226
        %s228 = sand.u32 %s114, 1
        %s229 = smul.addr %s228, 4
        %s230 = scalar_lea.vmem [#allocation9], %s229
        %v231 = vld [vmem:[%s207] sm:$0x3]
        %s232 = scalar_lea.vmem %s207, 2 [#allocation8]
        %v233 = vld [vmem:[%s232] sm:$0x3]
        %s234 = scalar_lea.vmem %s207, 4 [#allocation8]
        %v235 = vld [vmem:[%s234] sm:$0x3]
        %s236 = smul.u32 %s26, 128
        %s237 = sld [smem:[#allocation2 + %s236]]
        %v238 = vstv %s237
        %v239 = vmul.f32 %v238, %v231
        %s240 = sadd.s32 %s236, 1
        %s241 = sld [smem:[#allocation2 + %s240]]
        %v242 = vstv %s241
        %v243 = vmul.f32 %v242, %v233
        %v244 = vadd.f32 %v239, %v243
        %s245 = sadd.s32 %s236, 2
        %s246 = sld [smem:[#allocation2 + %s245]]
        %v247 = vstv %s246
        %v248 = vmul.f32 %v247, %v235
        %v249 = vadd.f32 %v244, %v248
        %s250 = sld [smem:[#allocation7 + %s236]]
        %v251 = vstv %s250
        %v252 = vadd.f32 %v249, %v251
        %s253 = sadd.s32 %s236, 3
        %s254 = sld [smem:[#allocation2 + %s253]]
        %v255 = vstv %s254
        %v256 = vmul.f32 %v255, %v231
        %s257 = sadd.s32 %s236, 4
        %s258 = sld [smem:[#allocation2 + %s257]]
        %v259 = vstv %s258
        %v260 = vmul.f32 %v259, %v233
        %v261 = vadd.f32 %v256, %v260
        %s262 = sadd.s32 %s236, 5
        %s263 = sld [smem:[#allocation2 + %s262]]
        %v264 = vstv %s263
        %v265 = vmul.f32 %v264, %v235
        %v266 = vadd.f32 %v261, %v265
        %s267 = sld [smem:[#allocation7 + %s240]]
        %v268 = vstv %s267
        %v269 = vadd.f32 %v266, %v268
        %s270 = sadd.s32 %s236, 6
        %s271 = sld [smem:[#allocation2 + %s270]]
        %v272 = vstv %s271
        %v273 = vmul.f32 %v272, %v231
        %s274 = sadd.s32 %s236, 7
        %s275 = sld [smem:[#allocation2 + %s274]]
        %v276 = vstv %s275
        %v277 = vmul.f32 %v276, %v233
        %v278 = vadd.f32 %v273, %v277
        %s279 = sadd.s32 %s236, 8
        %s280 = sld [smem:[#allocation2 + %s279]]
        %v281 = vstv %s280
        %v282 = vmul.f32 %v281, %v235
        %v283 = vadd.f32 %v278, %v282
        %s284 = sld [smem:[#allocation7 + %s245]]
        %v285 = vstv %s284
        %v286 = vadd.f32 %v283, %v285
        %v287 = vrcp.pop %v286
        %v288 = vmul.f32 %v252, %v287
        %289 = vst [vmem:[%s230] sm:$0x3] %v288
        %v290 = vmul.f32 %v269, %v287
        %s291 = scalar_lea.vmem %s230, 2 [#allocation9]
        %292 = vst [vmem:[%s291] sm:$0x3] %v290
        %s293 = sand.u32 %s114, 1
        %s294 = scalar_lea.sflag [#allocation4], %s293
        %s295 = sand.u32 %s114, 1
        %s296 = smul.addr %s295, 4
        %s297 = scalar_lea.vmem [#allocation9], %s296
        // Predicated region
        $region45: #{tpu_custom_call.1} parent=31 // pred_check
          %p298 = pneg %p124
        $region46: #{tpu_custom_call.1} parent=31 // pred_check_branch
          %300 = sbr.rel (%p298) target = $region48
        $region47: #{tpu_custom_call.1} parent=31 // pred_region
          %s302 = ssub.s32 64, 64
          %303 = vsyncadd %s294, %s302
          %s304 = smul.addr %s26, 2
          %s305 = sadd.s32 %s27, %s304
          %s306 = smul.addr %s305, 32
          %s307 = scalar_lea.hbm %s3, %s306
          %s308 = sshll.u32 %s297, 4
          %s309 = int_to_ptr.vmem [resolvable:$true] %s308
          %314 = dma.vmem_to_hbm [thread:$0]  %s309, 64, %s307, %s294, 32, 32, 2
        $region48: #{tpu_custom_call.1} parent=31 // pred_fallthru
          _
      $region32: #{tpu_custom_call.1} parent=5 // pred_fallthru
        _
      %p315 = scmp.le.s32.totalorder 2, %s17
      // Predicated region
      $region49: #{tpu_custom_call.1} parent=5 // pred_check
        %p316 = pneg %p315
      $region50: #{tpu_custom_call.1} parent=5 // pred_check_branch
        %318 = sbr.rel (%p316) target = $region52
      $region51: #{tpu_custom_call.1} parent=5 // pred_region
        %s319 = ssub.s32 %s17, 2
        // Predicated region
        $region53: #{tpu_custom_call.1} parent=51 // pred_check
          %p320 = pneg %p130
        $region54: #{tpu_custom_call.1} parent=51 // pred_check_branch
          %322 = sbr.rel (%p320) target = $region56
        $region55: #{tpu_custom_call.1} parent=51 // pred_region
          %s323 = sand.u32 %s115, 1
          %s324 = scalar_lea.sflag [#allocation4], %s323
          %s325 = sand.u32 %s115, 1
          %s326 = smul.addr %s325, 4
          %s327 = scalar_lea.vmem [#allocation9], %s326
          %328 = dma.done %s324, 64
        $region56: #{tpu_custom_call.1} parent=51 // pred_fallthru
          _
      $region52: #{tpu_custom_call.1} parent=5 // pred_fallthru
        _
    $region6: #{tpu_custom_call.1} parent=1 // loop_footer
      %s21 = sadd.s32 1, %s17
    $region7: #{tpu_custom_call.1} parent=1 // loop_footer_branch
      %16 = sbr.rel target = $region3
    $region8: #{tpu_custom_call.1} parent=1 // loop_exit
      _
    %329 = vsyncpa [#allocation3], 1
    %s330 = scalar_lea.sflag [#allocation3], 1
    %331 = vsyncpa %s330, 1
    %332 = vsyncpa [#allocation4], 1
    %s333 = scalar_lea.sflag [#allocation4], 1
    %334 = vsyncpa %s333, 1
    %335 = vsyncpa [#allocation5], 1
    %s336 = scalar_lea.sflag [#allocation5], 1
    %337 = vsyncpa %s336, 1
    %338 = vsyncpa [#allocation6], 1
    %s339 = scalar_lea.sflag [#allocation6], 1
    %340 = vsyncpa %s339, 1

</llo_original>
